<compile_context>
chip_gen: v7x
topology: tpu7x:2x2x1
jax: 0.10.0
libtpu: 0.0.40
codegen_flags: <defaults>
</compile_context>

<pallas_src>
import functools

import jax
import jax.numpy as jnp
from jax.experimental import pallas as pl
from jax.experimental.pallas import tpu as pltpu


_MAX_LANE = 1024                     # widest lane-dense last dim (8 vregs)
_SMALL_FALLBACK_BYTES = 1 << 20      # below this, plain JAX wins


def _round_up(a: int, m: int) -> int:
    return ((a + m - 1) // m) * m


def _pick_lane(total: int):
    """Largest multiple of 128 (<= _MAX_LANE) dividing `total`; else pad to 128."""
    lane = _MAX_LANE
    while lane >= 128:
        if total % lane == 0:
            return lane, 0
        lane -= 128
    return 128, _round_up(total, 128) - total


@functools.lru_cache(maxsize=None)
def _block_config():
    """(target_block_bytes, vmem_limit_bytes), gated on the TPU generation."""
    target_bytes = 4 * 1024 * 1024          # safe everywhere, incl. v7x (64 MiB VMEM/TC)
    vmem_limit = 32 * 1024 * 1024
    try:
        info = pltpu.get_tpu_info()
        if info.vmem_capacity_bytes >= 96 * 1024 * 1024:   # v5e / v6e: 128 MiB VMEM
            target_bytes = 8 * 1024 * 1024
            vmem_limit = 64 * 1024 * 1024
    except Exception:
        pass  # conservative defaults work on every generation
    return target_bytes, vmem_limit


def _silu_kernel(x_ref, o_ref):
    # Elementwise hot path: o = x * sigmoid(x), computed in f32 (no-op cast for
    # f32 inputs, keeps bf16 inputs accurate); sigmoid lowers to the EUP slot.
    # NOTE: if a v7x bundle dump shows 2 EUP pushes per vreg for this sigmoid,
    # switch to x * pl.reciprocal(1 + jnp.exp(-x), approx=True).
    x = x_ref[...].astype(jnp.float32)
    o_ref[...] = (x * jax.nn.sigmoid(x)).astype(o_ref.dtype)


def _pallas_elementwise_lambda(x, *, min_pallas_bytes=_SMALL_FALLBACK_BYTES,
                               donate_input=False):
    """The concrete `lmbd` handed to LambdaLayer; SiLU via a Pallas TPU kernel."""
    orig_shape = x.shape
    orig_dtype = x.dtype

    if not jnp.issubdtype(orig_dtype, jnp.floating):
        # SiLU only makes sense on floats; keep the dtype contract via plain JAX.
        xf = x.astype(jnp.float32)
        return (xf * jax.nn.sigmoid(xf)).astype(orig_dtype)

    total = 1
    for d in orig_shape:
        total *= d
    itemsize = jnp.dtype(orig_dtype).itemsize

    # Small-tensor fallback: launch/per-step overhead dominates; XLA fuses this.
    if total == 0 or total * itemsize < min_pallas_bytes:
        return x * jax.nn.sigmoid(x)

    # dtype-aware sublane multiple: (8,128) f32, (16,128) bf16, (32,128) int8.
    sub = {1: 32, 2: 16}.get(itemsize, 8)

    # Lane-dense view (rows, lane): lane is a multiple of 128 so stores are
    # full-width; when lane divides total the reshape is metadata-only.
    lane, pad = _pick_lane(total)
    rows = (total + pad) // lane

    target_block_bytes, vmem_limit = _block_config()
    block_rows = max(sub, (target_block_bytes // (lane * itemsize)) // sub * sub)
    if rows <= block_rows:
        block_rows = _round_up(rows, sub) if rows >= sub else rows

    nb = pl.cdiv(rows, block_rows)
    if nb == 1 and rows >= 2 * sub:
        # Split into 2 steps so both v7x TensorCores get work under ("parallel",).
        block_rows = _round_up(pl.cdiv(rows, 2), sub)
    elif nb > 1 and nb % 2 == 1:
        # Best-effort nudge toward an even step count (megacore load balance).
        cand = max(sub, _round_up(pl.cdiv(rows, nb + 1), sub))
        if pl.cdiv(rows, cand) % 2 == 0:
            block_rows = cand
    nb = pl.cdiv(rows, block_rows)

    xf = x.reshape(-1)
    if pad:
        xf = jnp.pad(xf, (0, pad))           # <= 127 elements, rare path
    x2d = xf.reshape(rows, lane)

    out = pl.pallas_call(
        _silu_kernel,
        out_shape=jax.ShapeDtypeStruct((rows, lane), orig_dtype),
        grid_spec=pltpu.PrefetchScalarGridSpec(
            num_scalar_prefetch=0,
            grid=(nb,),
            in_specs=[pl.BlockSpec((block_rows, lane), lambda i: (i, 0))],
            out_specs=pl.BlockSpec((block_rows, lane), lambda i: (i, 0)),
        ),
        compiler_params=pltpu.CompilerParams(
            dimension_semantics=("parallel",),
            vmem_limit_bytes=vmem_limit,
        ),
        # Same shape/dtype in and out: alias when the caller donates the input
        # (removes the second HBM allocation; XLA copy-protects otherwise).
        input_output_aliases={0: 0} if donate_input else {},
    )(x2d)

    if pad:
        out = out.reshape(-1)[:total]
    return out.reshape(orig_shape)


class LambdaLayer:
    """JAX equivalent of the PyTorch LambdaLayer: applies a stored callable."""

    def __init__(self, lmbd):
        self.lmbd = lmbd

    def __call__(self, x):
        return self.lmbd(x)


if __name__ == "__main__":
    key = jax.random.PRNGKey(0)
    k1, k2 = jax.random.split(key)

    layer = LambdaLayer(_pallas_elementwise_lambda)

    # Small NCHW feature map, consistent with conv-net usage of LambdaLayer.
    x_small = jax.random.normal(k1, (2, 4, 16, 16), dtype=jnp.float32)

    # Default path: tiny tensors take the plain-JAX fallback (feedback item 3).
    y_small = jax.block_until_ready(layer(x_small))
    ref_small = x_small * jax.nn.sigmoid(x_small)
    assert y_small.shape == x_small.shape and y_small.dtype == x_small.dtype
    assert jnp.allclose(y_small, ref_small, atol=1e-5, rtol=1e-5)

    # Force the Pallas kernel on the same small input (single-block path).
    y_pl = jax.block_until_ready(
        _pallas_elementwise_lambda(x_small, min_pallas_bytes=0))
    assert y_pl.shape == x_small.shape and y_pl.dtype == x_small.dtype
    assert jnp.allclose(y_pl, ref_small, atol=1e-5, rtol=1e-5)

    # Medium feature map exercises the multi-block grid + ragged final block.
    x_med = jax.random.normal(k2, (2, 32, 56, 56), dtype=jnp.float32)
    y_med = jax.block_until_ready(
        _pallas_elementwise_lambda(x_med, min_pallas_bytes=0))
    ref_med = x_med * jax.nn.sigmoid(x_med)
    assert jnp.allclose(y_med, ref_med, atol=1e-5, rtol=1e-5)

    print("KERNEL_OK")
</pallas_src>

<mosaic_0001>
module attributes {stable_mosaic.version = 11 : i64} {
  func.func @_silu_kernel(%arg0: i32, %arg1: memref<2x1024xf32, #tpu.memory_space<vmem>>, %arg2: memref<2x1024xf32, #tpu.memory_space<vmem>>) attributes {dimension_semantics = [#tpu.dimension_semantics<parallel>], iteration_bounds = array<i64: 1>, scalar_prefetch = 0 : i64, scratch_operands = 0 : i64, tpu.core_type = #tpu.core_type<tc>, window_params = [{transform_indices = @transform_0, window_bounds = array<i64: 2, 1024>}, {transform_indices = @transform_1, window_bounds = array<i64: 2, 1024>}]} {
    %c0 = arith.constant 0 : index
    %c0_0 = arith.constant 0 : index
    %0 = vector.load %arg1[%c0, %c0_0] : memref<2x1024xf32, #tpu.memory_space<vmem>>, vector<2x1024xf32>
    %1 = arith.negf %0 : vector<2x1024xf32>
    %2 = math.exp %1 : vector<2x1024xf32>
    %cst = arith.constant 1.000000e+00 : f32
    %3 = vector.broadcast %cst : f32 to vector<2x1024xf32>
    %4 = arith.addf %3, %2 : vector<2x1024xf32>
    %5 = arith.divf %3, %4 : vector<2x1024xf32>
    %6 = arith.mulf %0, %5 : vector<2x1024xf32>
    %c0_1 = arith.constant 0 : index
    %c0_2 = arith.constant 0 : index
    %7 = vector.load %arg2[%c0_1, %c0_2] : memref<2x1024xf32, #tpu.memory_space<vmem>>, vector<2x1024xf32>
    tpu.vector_store %arg2[%c0_1, %c0_2], %6 {strides = array<i32>} : memref<2x1024xf32, #tpu.memory_space<vmem>>, vector<2x1024xf32>,
    return
  }
  func.func @transform_0(%arg0: i32) -> (i32, i32) {
    %c0_i32 = arith.constant 0 : i32
    %c0_i32_0 = arith.constant 0 : i32
    return %arg0, %c0_i32 : i32, i32
  }
  func.func @transform_1(%arg0: i32) -> (i32, i32) {
    %c0_i32 = arith.constant 0 : i32
    %c0_i32_0 = arith.constant 0 : i32
    return %arg0, %c0_i32 : i32, i32
  }
}

</mosaic_0001>

<llo_original>
// kernel: tpu_custom_call.1
$region0: #{tpu_custom_call.1}
  #allocation0 [shape = 'u32[]', space=smem, size = 0x4, offset = 0x4, fixed_abs, tag = 'smem constant byte address 0x4 - core index']
  #allocation1 [shape = 'u32[144,128]{1,0:T(1,128)}', space=vmem, size = 0x12000, scoped, tag = 'internal scratch']
  %s0 = inlined_call_operand.hbm [shape: f32[2,1024], index: 0, kind: input, shape index: {}]
  %s1 = inlined_call_operand.hbm [shape: f32[2,1024], index: 1, kind: output, shape index: {}]
  %s2 = sld [smem:[#allocation0]]
  $region18: #{tpu_custom_call.1} parent=0
    _
  %s4 = ssub.s32 1, %s2
  %s5 = scalar_select 0, %s4, %s2
  $region1: #{tpu_custom_call.1} parent=0
    #allocation2 [shape = 'u8[8192]{0}', space=vmem, size = 0x2000, scoped, tag = 'input window, operand 0, single buffered']
    #allocation3 [shape = 's32[1]{0}', space=sflag, size = 0x4, scoped, tag = 'scoped memory for tpu_custom_call.1']
    #allocation4 [shape = 's32[1]{0}', space=sflag, size = 0x4, scoped, tag = 'scoped memory for tpu_custom_call.1']
    #allocation5 [shape = 'u8[8192]{0}', space=vmem, size = 0x2000, scoped, tag = 'output window, operand 0, single buffered']
    %6 = vsyncpa [#allocation3], 0
    %7 = vsyncpa [#allocation4], 0
    // Predicated region
    $region2: #{tpu_custom_call.1} parent=1 // pred_check
      _
    $region3: #{tpu_custom_call.1} parent=1 // pred_check_branch
      %9 = sbr.rel (0) target = $region5
    $region4: #{tpu_custom_call.1} parent=1 // pred_region
      %s11 = ssub.s32 256, 256
      %12 = vsyncadd [#allocation3], %s11
      %s14 = sshll.u32 [#allocation2], 4
      %s15 = int_to_ptr.vmem [resolvable:$true] %s14
      %17 = dma.hbm_to_vmem [thread:$0]  %s0, 256, %s15, [#allocation3]
    $region5: #{tpu_custom_call.1} parent=1 // pred_fallthru
      _
    // Predicated region
    $region6: #{tpu_custom_call.1} parent=1 // pred_check
      _
    $region7: #{tpu_custom_call.1} parent=1 // pred_check_branch
      %19 = sbr.rel (0) target = $region9
    $region8: #{tpu_custom_call.1} parent=1 // pred_region
      %20 = dma.done [#allocation3], 256
    $region9: #{tpu_custom_call.1} parent=1 // pred_fallthru
      _
    %v21 = vld [vmem:[#allocation2] sm:$0xff]
    %v22 = vld [vmem:[#allocation2 + $0x8] sm:$0xff]
    %v23 = vxor.u32 %v21, 2147483648
    %v24 = vxor.u32 %v22, 2147483648
    %v25 = vmul.f32 %v23, 1.442695
    %v26 = vpow.pop %v25
    %v27 = vmul.f32 %v24, 1.442695
    %v28 = vpow.pop %v27
    %v29 = vadd.f32 %v26, 1.0
    %v30 = vadd.f32 %v28, 1.0
    %v31 = vrcp.pop %v29
    %v32 = vmul.f32 1.0, %v31
    %v33 = vrcp.pop %v30
    %v34 = vmul.f32 1.0, %v33
    %v35 = vmul.f32 %v21, %v32
    %v36 = vmul.f32 %v22, %v34
    %37 = vst [vmem:[#allocation5] sm:$0xff] %v35
    %38 = vst [vmem:[#allocation5 + $0x8] sm:$0xff] %v36
    // Predicated region
    $region10: #{tpu_custom_call.1} parent=1 // pred_check
      _
    $region11: #{tpu_custom_call.1} parent=1 // pred_check_branch
      %40 = sbr.rel (0) target = $region13
    $region12: #{tpu_custom_call.1} parent=1 // pred_region
      %s42 = ssub.s32 256, 256
      %43 = vsyncadd [#allocation4], %s42
      %s45 = sshll.u32 [#allocation5], 4
      %s46 = int_to_ptr.vmem [resolvable:$true] %s45
      %48 = dma.vmem_to_hbm [thread:$0]  %s46, 256, %s1, [#allocation4]
    $region13: #{tpu_custom_call.1} parent=1 // pred_fallthru
      _
    // Predicated region
    $region14: #{tpu_custom_call.1} parent=1 // pred_check
      _
    $region15: #{tpu_custom_call.1} parent=1 // pred_check_branch
      %50 = sbr.rel (0) target = $region17
    $region16: #{tpu_custom_call.1} parent=1 // pred_region
      %51 = dma.done [#allocation4], 256
    $region17: #{tpu_custom_call.1} parent=1 // pred_fallthru
      _
    %52 = vsyncpa [#allocation3], 1
    %53 = vsyncpa [#allocation4], 1

</llo_original>
